<compile_context>
chip_gen: v6e
topology: v6e:2x2x1
jax: 0.10.0
libtpu: 0.0.40
codegen_flags: <defaults>
</compile_context>

<pallas_src>
import functools

import jax
import jax.numpy as jnp
from jax.experimental import pallas as pl
from jax.experimental.pallas import tpu as pltpu


def _ceil_to(x, m):
    return ((x + m - 1) // m) * m


def _gaussian_smearing_kernel(dist_ref, out_ref, *, coeff, start, step, g):
    # dist_ref: (TM, 1) f32 tile of flattened distances (rows on sublanes)
    # out_ref:  (TM, G) tile (G on lanes)
    d = dist_ref[...]                                            # (TM, 1)
    idx = jax.lax.broadcasted_iota(jnp.int32, (1, g), 1)         # (1, G)
    off = start + step * idx.astype(jnp.float32)                 # (1, G)  iota + fma
    diff = d - off                                               # (TM, G) VPU broadcast
    out_ref[...] = jnp.exp(coeff * (diff * diff)).astype(out_ref.dtype)  # EUP exp


def gaussian_smearing(dist, *, start=0.0, stop=5.0, num_gaussians=50,
                      tm=8192, out_dtype=jnp.float32):
    """dist: any-shape f32 array of distances. Returns (dist.size, G) out_dtype."""
    g = int(num_gaussians)
    if g < 2:
        raise ValueError("num_gaussians must be >= 2 (step/coeff undefined otherwise).")
    step = (float(stop) - float(start)) / (g - 1)
    coeff = -0.5 / step ** 2

    flat2d = jnp.reshape(dist, (-1, 1)).astype(jnp.float32)      # (N, 1), contiguous HBM
    n = flat2d.shape[0]

    # Row tile: big (amortize ~0.35 us/grid-step), multiple of 8 sublanes,
    # never (much) larger than N, and >=2 roughly balanced steps for non-tiny
    # N so v7x can shard rows across its two TensorCores.
    tm_req = _ceil_to(int(tm), 8)
    if n >= 1024:
        tm_req = min(tm_req, _ceil_to(pl.cdiv(n, 2), 8))
    tm_eff = min(tm_req, _ceil_to(n, 8))
    grid = (pl.cdiv(n, tm_eff),)

    # Explicit scoped-VMEM limit: both blocks pad to 128 lanes, double
    # buffered, plus headroom. Clamp to [32 MiB, 48 MiB]: above v5e's 16 MiB
    # default scoped limit, below v7x's 64 MiB physical VMEM.
    out_itemsize = jnp.dtype(out_dtype).itemsize
    needed = 2 * (tm_eff * 128 * 4 + tm_eff * 128 * out_itemsize) + (4 << 20)
    vmem_limit = int(min(48 << 20, max(32 << 20, needed)))

    kernel = functools.partial(
        _gaussian_smearing_kernel,
        coeff=float(coeff), start=float(start), step=float(step), g=g,
    )

    out = pl.pallas_call(
        kernel,
        out_shape=jax.ShapeDtypeStruct((n, g), out_dtype),
        grid_spec=pltpu.PrefetchScalarGridSpec(
            num_scalar_prefetch=0,
            grid=grid,
            in_specs=[
                pl.BlockSpec((tm_eff, 1), lambda i: (i, 0)),     # dist rows tile
            ],
            out_specs=pl.BlockSpec((tm_eff, g), lambda i: (i, 0)),
        ),
        compiler_params=pltpu.CompilerParams(
            dimension_semantics=("parallel",),                   # megacore row sharding
            vmem_limit_bytes=vmem_limit,
        ),
    )(flat2d)

    return out


class GaussianSmearingJax:
    """Parameter setup mirroring the PyTorch __init__ (deterministic)."""

    def __init__(self, start=0.0, stop=5.0, num_gaussians=50, out_dtype=jnp.float32):
        if int(num_gaussians) < 2:
            raise ValueError("num_gaussians must be >= 2.")
        self.start = float(start)
        self.stop = float(stop)
        self.num_gaussians = int(num_gaussians)
        self.out_dtype = out_dtype
        self.step = (self.stop - self.start) / (self.num_gaussians - 1)
        self.coeff = -0.5 / self.step ** 2
        # same formula the kernel uses (start + i*step); matches torch.linspace
        # up to ~1 ulp on the last entry.
        self.offset = self.start + self.step * jnp.arange(
            self.num_gaussians, dtype=jnp.float32)

    def __call__(self, dist):
        return gaussian_smearing(
            dist,
            start=self.start, stop=self.stop,
            num_gaussians=self.num_gaussians,
            out_dtype=self.out_dtype,
        )


if __name__ == "__main__":
    key = jax.random.PRNGKey(0)
    k1, k2, k3 = jax.random.split(key, 3)
    mod = GaussianSmearingJax(start=0.0, stop=5.0, num_gaussians=50)

    def ref_fn(d):
        d2 = d.reshape(-1, 1).astype(jnp.float32) - mod.offset.reshape(1, -1)
        return jnp.exp(mod.coeff * d2 * d2)

    # Case 1: 128 pairwise distances in [0, 5) (single aligned block).
    dist1 = jax.random.uniform(k1, (128,), dtype=jnp.float32, minval=0.0, maxval=5.0)
    out1 = jax.block_until_ready(mod(dist1))
    assert out1.shape == (128, 50)
    assert jnp.allclose(out1, ref_fn(dist1), atol=1e-6, rtol=1e-5)

    # Case 2: 2-D input with non-aligned row count (view(-1,1) + masked partial block).
    dist2 = jax.random.uniform(k2, (10, 20), dtype=jnp.float32, minval=0.0, maxval=5.0)
    out2 = jax.block_until_ready(mod(dist2))
    assert out2.shape == (200, 50)
    assert jnp.allclose(out2, ref_fn(dist2), atol=1e-6, rtol=1e-5)

    # Case 3: larger 1-D input -> >=2 grid steps + masked last block.
    dist3 = jax.random.uniform(k3, (2500,), dtype=jnp.float32, minval=0.0, maxval=5.0)
    out3 = jax.block_until_ready(mod(dist3))
    assert out3.shape == (2500, 50)
    assert jnp.allclose(out3, ref_fn(dist3), atol=1e-6, rtol=1e-5)

    # bf16-output variant (for the HBM-write-bound v5e/v6e regime).
    out_bf16 = jax.block_until_ready(
        gaussian_smearing(dist3, start=0.0, stop=5.0, num_gaussians=50,
                          out_dtype=jnp.bfloat16))
    assert out_bf16.shape == (2500, 50) and out_bf16.dtype == jnp.bfloat16
    assert jnp.allclose(out_bf16.astype(jnp.float32), ref_fn(dist3),
                        atol=1e-2, rtol=1e-2)

    print("KERNEL_OK")
</pallas_src>

<mosaic_0001>
module attributes {stable_mosaic.version = 11 : i64} {
  func.func @_gaussian_smearing_kernel(%arg0: i32, %arg1: memref<128x1xf32, #tpu.memory_space<vmem>>, %arg2: memref<128x50xf32, #tpu.memory_space<vmem>>) attributes {dimension_semantics = [#tpu.dimension_semantics<parallel>], iteration_bounds = array<i64: 1>, scalar_prefetch = 0 : i64, scratch_operands = 0 : i64, tpu.core_type = #tpu.core_type<tc>, window_params = [{transform_indices = @transform_0, window_bounds = array<i64: 128, 1>}, {transform_indices = @transform_1, window_bounds = array<i64: 128, 50>}]} {
    %c0 = arith.constant 0 : index
    %c0_0 = arith.constant 0 : index
    %0 = vector.load %arg1[%c0, %c0_0] : memref<128x1xf32, #tpu.memory_space<vmem>>, vector<128x1xf32>
    %1 = tpu.iota {dimensions = array<i32: 1>} : vector<1x50xi32>
    %2 = arith.sitofp %1 : vector<1x50xi32> to vector<1x50xf32>
    %cst = arith.constant 0.10204082 : f32
    %3 = vector.broadcast %cst : f32 to vector<1x50xf32>
    %4 = arith.mulf %3, %2 : vector<1x50xf32>
    %cst_1 = arith.constant 0.000000e+00 : f32
    %5 = vector.broadcast %cst_1 : f32 to vector<1x50xf32>
    %6 = arith.addf %5, %4 : vector<1x50xf32>
    %7 = vector.broadcast %0 : vector<128x1xf32> to vector<128x50xf32>
    %8 = vector.broadcast %6 : vector<1x50xf32> to vector<128x50xf32>
    %9 = arith.subf %7, %8 : vector<128x50xf32>
    %10 = arith.mulf %9, %9 : vector<128x50xf32>
    %cst_2 = arith.constant -4.802000e+01 : f32
    %11 = vector.broadcast %cst_2 : f32 to vector<128x50xf32>
    %12 = arith.mulf %11, %10 : vector<128x50xf32>
    %13 = math.exp %12 : vector<128x50xf32>
    %c0_3 = arith.constant 0 : index
    %c0_4 = arith.constant 0 : index
    %14 = vector.load %arg2[%c0_3, %c0_4] : memref<128x50xf32, #tpu.memory_space<vmem>>, vector<128x50xf32>
    tpu.vector_store %arg2[%c0_3, %c0_4], %13 {strides = array<i32>} : memref<128x50xf32, #tpu.memory_space<vmem>>, vector<128x50xf32>,
    return
  }
  func.func @transform_0(%arg0: i32) -> (i32, i32) {
    %c0_i32 = arith.constant 0 : i32
    %c0_i32_0 = arith.constant 0 : i32
    return %arg0, %c0_i32 : i32, i32
  }
  func.func @transform_1(%arg0: i32) -> (i32, i32) {
    %c0_i32 = arith.constant 0 : i32
    %c0_i32_0 = arith.constant 0 : i32
    return %arg0, %c0_i32 : i32, i32
  }
}

</mosaic_0001>

<llo_original>
// kernel: tpu_custom_call.1
$region0: #{tpu_custom_call.1}
  #allocation0 [shape = 'u32[]', space=smem, size = 0x4, offset = 0x4, fixed_abs, tag = 'smem constant byte address 0x4 - core index']
  #allocation1 [shape = 'u32[144,128]{1,0:T(1,128)}', space=vmem, size = 0x12000, scoped, tag = 'internal scratch']
  %s0 = inlined_call_operand.vmem [shape: f32[128,1], index: 0, kind: input, shape index: {}]
  %s1 = inlined_call_operand.vmem [shape: f32[128,50], index: 1, kind: output, shape index: {}]
  %s2 = sld [smem:[#allocation0]]
  $region14: #{tpu_custom_call.1} parent=0
    _
  %s4 = ssub.s32 1, %s2
  %s5 = scalar_select 0, %s4, %s2
  // Predicated region
  $region2: #{tpu_custom_call.1} parent=0 // pred_check
    _
  $region3: #{tpu_custom_call.1} parent=0 // pred_check_branch
    %7 = sbr.rel (0) target = $region5
  $region4: #{tpu_custom_call.1} parent=0 // pred_region
    _
  $region5: #{tpu_custom_call.1} parent=0 // pred_fallthru
    _
  %v8 = vld [vmem:[%s0] sm:$0xff]
  %v9 = vld [vmem:[%s0 + $0x8] sm:$0xff]
  %v10 = vld [vmem:[%s0 + $0x10] sm:$0xff]
  %v11 = vld [vmem:[%s0 + $0x18] sm:$0xff]
  %v12 = vld [vmem:[%s0 + $0x20] sm:$0xff]
  %v13 = vld [vmem:[%s0 + $0x28] sm:$0xff]
  %v14 = vld [vmem:[%s0 + $0x30] sm:$0xff]
  %v15 = vld [vmem:[%s0 + $0x38] sm:$0xff]
  %v16 = vld [vmem:[%s0 + $0x40] sm:$0xff]
  %v17 = vld [vmem:[%s0 + $0x48] sm:$0xff]
  %v18 = vld [vmem:[%s0 + $0x50] sm:$0xff]
  %v19 = vld [vmem:[%s0 + $0x58] sm:$0xff]
  %v20 = vld [vmem:[%s0 + $0x60] sm:$0xff]
  %v21 = vld [vmem:[%s0 + $0x68] sm:$0xff]
  %v22 = vld [vmem:[%s0 + $0x70] sm:$0xff]
  %v23 = vld [vmem:[%s0 + $0x78] sm:$0xff]
  %v24 = vlaneseq
  %v25 = vand.u32 %v24, 127
  %v26 = vcvt.s32.f32 %v25
  %v27 = vmul.f32 %v26, 0.10204082
  %v28 = vadd.f32 %v27, 0.0
  %30 = vset.pattern.permute.xlu0 0
  %31 = vperm.xlu0 %30, %v8
  %v32 = vpop.permute.xlu0 %31
  %35 = vset.pattern.permute.xlu0 0
  %36 = vperm.xlu0 %35, %v9
  %v37 = vpop.permute.xlu0 %36
  %40 = vset.pattern.permute.xlu0 0
  %41 = vperm.xlu0 %40, %v10
  %v42 = vpop.permute.xlu0 %41
  %45 = vset.pattern.permute.xlu0 0
  %46 = vperm.xlu0 %45, %v11
  %v47 = vpop.permute.xlu0 %46
  %50 = vset.pattern.permute.xlu0 0
  %51 = vperm.xlu0 %50, %v12
  %v52 = vpop.permute.xlu0 %51
  %55 = vset.pattern.permute.xlu0 0
  %56 = vperm.xlu0 %55, %v13
  %v57 = vpop.permute.xlu0 %56
  %60 = vset.pattern.permute.xlu0 0
  %61 = vperm.xlu0 %60, %v14
  %v62 = vpop.permute.xlu0 %61
  %65 = vset.pattern.permute.xlu0 0
  %66 = vperm.xlu0 %65, %v15
  %v67 = vpop.permute.xlu0 %66
  %70 = vset.pattern.permute.xlu0 0
  %71 = vperm.xlu0 %70, %v16
  %v72 = vpop.permute.xlu0 %71
  %75 = vset.pattern.permute.xlu0 0
  %76 = vperm.xlu0 %75, %v17
  %v77 = vpop.permute.xlu0 %76
  %80 = vset.pattern.permute.xlu0 0
  %81 = vperm.xlu0 %80, %v18
  %v82 = vpop.permute.xlu0 %81
  %85 = vset.pattern.permute.xlu0 0
  %86 = vperm.xlu0 %85, %v19
  %v87 = vpop.permute.xlu0 %86
  %90 = vset.pattern.permute.xlu0 0
  %91 = vperm.xlu0 %90, %v20
  %v92 = vpop.permute.xlu0 %91
  %95 = vset.pattern.permute.xlu0 0
  %96 = vperm.xlu0 %95, %v21
  %v97 = vpop.permute.xlu0 %96
  %100 = vset.pattern.permute.xlu0 0
  %101 = vperm.xlu0 %100, %v22
  %v102 = vpop.permute.xlu0 %101
  %105 = vset.pattern.permute.xlu0 0
  %106 = vperm.xlu0 %105, %v23
  %v107 = vpop.permute.xlu0 %106
  %v109 = vsub.f32 %v32, %v28
  %v110 = vsub.f32 %v37, %v28
  %v111 = vsub.f32 %v42, %v28
  %v112 = vsub.f32 %v47, %v28
  %v113 = vsub.f32 %v52, %v28
  %v114 = vsub.f32 %v57, %v28
  %v115 = vsub.f32 %v62, %v28
  %v116 = vsub.f32 %v67, %v28
  %v117 = vsub.f32 %v72, %v28
  %v118 = vsub.f32 %v77, %v28
  %v119 = vsub.f32 %v82, %v28
  %v120 = vsub.f32 %v87, %v28
  %v121 = vsub.f32 %v92, %v28
  %v122 = vsub.f32 %v97, %v28
  %v123 = vsub.f32 %v102, %v28
  %v124 = vsub.f32 %v107, %v28
  %v125 = vmul.f32 %v109, %v109
  %v126 = vmul.f32 %v110, %v110
  %v127 = vmul.f32 %v111, %v111
  %v128 = vmul.f32 %v112, %v112
  %v129 = vmul.f32 %v113, %v113
  %v130 = vmul.f32 %v114, %v114
  %v131 = vmul.f32 %v115, %v115
  %v132 = vmul.f32 %v116, %v116
  %v133 = vmul.f32 %v117, %v117
  %v134 = vmul.f32 %v118, %v118
  %v135 = vmul.f32 %v119, %v119
  %v136 = vmul.f32 %v120, %v120
  %v137 = vmul.f32 %v121, %v121
  %v138 = vmul.f32 %v122, %v122
  %v139 = vmul.f32 %v123, %v123
  %v140 = vmul.f32 %v124, %v124
  %v141 = vmul.f32 %v125, -48.02
  %v142 = vmul.f32 %v126, -48.02
  %v143 = vmul.f32 %v127, -48.02
  %v144 = vmul.f32 %v128, -48.02
  %v145 = vmul.f32 %v129, -48.02
  %v146 = vmul.f32 %v130, -48.02
  %v147 = vmul.f32 %v131, -48.02
  %v148 = vmul.f32 %v132, -48.02
  %v149 = vmul.f32 %v133, -48.02
  %v150 = vmul.f32 %v134, -48.02
  %v151 = vmul.f32 %v135, -48.02
  %v152 = vmul.f32 %v136, -48.02
  %v153 = vmul.f32 %v137, -48.02
  %v154 = vmul.f32 %v138, -48.02
  %v155 = vmul.f32 %v139, -48.02
  %v156 = vmul.f32 %v140, -48.02
  %v157 = vmul.f32 %v141, 1.442695
  %v158 = vpow.pop %v157
  %v159 = vmul.f32 %v142, 1.442695
  %v160 = vpow.pop %v159
  %v161 = vmul.f32 %v143, 1.442695
  %v162 = vpow.pop %v161
  %v163 = vmul.f32 %v144, 1.442695
  %v164 = vpow.pop %v163
  %v165 = vmul.f32 %v145, 1.442695
  %v166 = vpow.pop %v165
  %v167 = vmul.f32 %v146, 1.442695
  %v168 = vpow.pop %v167
  %v169 = vmul.f32 %v147, 1.442695
  %v170 = vpow.pop %v169
  %v171 = vmul.f32 %v148, 1.442695
  %v172 = vpow.pop %v171
  %v173 = vmul.f32 %v149, 1.442695
  %v174 = vpow.pop %v173
  %v175 = vmul.f32 %v150, 1.442695
  %v176 = vpow.pop %v175
  %v177 = vmul.f32 %v151, 1.442695
  %v178 = vpow.pop %v177
  %v179 = vmul.f32 %v152, 1.442695
  %v180 = vpow.pop %v179
  %v181 = vmul.f32 %v153, 1.442695
  %v182 = vpow.pop %v181
  %v183 = vmul.f32 %v154, 1.442695
  %v184 = vpow.pop %v183
  %v185 = vmul.f32 %v155, 1.442695
  %v186 = vpow.pop %v185
  %v187 = vmul.f32 %v156, 1.442695
  %v188 = vpow.pop %v187
  %vm189 = vcmask 408576
  %190 = vst.msk [vmem:[%s1] sm:$0xff] %vm189, %v158
  %191 = vst.msk [vmem:[%s1 + $0x8] sm:$0xff] %vm189, %v160
  %192 = vst.msk [vmem:[%s1 + $0x10] sm:$0xff] %vm189, %v162
  %193 = vst.msk [vmem:[%s1 + $0x18] sm:$0xff] %vm189, %v164
  %194 = vst.msk [vmem:[%s1 + $0x20] sm:$0xff] %vm189, %v166
  %195 = vst.msk [vmem:[%s1 + $0x28] sm:$0xff] %vm189, %v168
  %196 = vst.msk [vmem:[%s1 + $0x30] sm:$0xff] %vm189, %v170
  %197 = vst.msk [vmem:[%s1 + $0x38] sm:$0xff] %vm189, %v172
  %198 = vst.msk [vmem:[%s1 + $0x40] sm:$0xff] %vm189, %v174
  %199 = vst.msk [vmem:[%s1 + $0x48] sm:$0xff] %vm189, %v176
  %200 = vst.msk [vmem:[%s1 + $0x50] sm:$0xff] %vm189, %v178
  %201 = vst.msk [vmem:[%s1 + $0x58] sm:$0xff] %vm189, %v180
  %202 = vst.msk [vmem:[%s1 + $0x60] sm:$0xff] %vm189, %v182
  %203 = vst.msk [vmem:[%s1 + $0x68] sm:$0xff] %vm189, %v184
  %204 = vst.msk [vmem:[%s1 + $0x70] sm:$0xff] %vm189, %v186
  %205 = vst.msk [vmem:[%s1 + $0x78] sm:$0xff] %vm189, %v188
  // Predicated region
  $region6: #{tpu_custom_call.1} parent=0 // pred_check
    _
  $region7: #{tpu_custom_call.1} parent=0 // pred_check_branch
    %207 = sbr.rel (0) target = $region9
  $region8: #{tpu_custom_call.1} parent=0 // pred_region
    _
  $region9: #{tpu_custom_call.1} parent=0 // pred_fallthru
    _
  // Predicated region
  $region10: #{tpu_custom_call.1} parent=0 // pred_check
    _
  $region11: #{tpu_custom_call.1} parent=0 // pred_check_branch
    %209 = sbr.rel (0) target = $region13
  $region12: #{tpu_custom_call.1} parent=0 // pred_region
    _
  $region13: #{tpu_custom_call.1} parent=0 // pred_fallthru
    _

</llo_original>
